<compile_context>
chip_gen: v7x
topology: tpu7x:2x2x1
jax: 0.10.0
libtpu: 0.0.40
codegen_flags: <defaults>
</compile_context>

<pallas_src>
import math
import functools

import jax
import jax.numpy as jnp
from jax.experimental import pallas as pl
from jax.experimental.pallas import tpu as pltpu

_MAX_TB = 128  # sublane-axis batch tile cap (multiple of 8)


def _learned_sinusoidal_kernel(x_ref, w_ref, o_ref, *, pad_last):
    # x_ref: (TB, 1) f32   w_ref: (1, H) f32   o_ref: (TB, 1 + 2H [+ 1])
    half_dim = w_ref.shape[1]
    x = x_ref[...]                                   # (TB, 1)
    w = w_ref[...] * (2.0 * math.pi)                 # fold 2*pi into the tiny tile
    freqs = x * w                                    # (TB, H) broadcast outer product

    # Sequential slice stores: only freqs + one result live at a time.
    o_ref[:, 0:1] = x.astype(o_ref.dtype)
    o_ref[:, 1:1 + half_dim] = jnp.sin(freqs).astype(o_ref.dtype)
    o_ref[:, 1 + half_dim:1 + 2 * half_dim] = jnp.cos(freqs).astype(o_ref.dtype)
    if pad_last:
        # odd emb_dim -> F.pad(..., (0, 1)): trailing zero column
        o_ref[:, 1 + 2 * half_dim:2 + 2 * half_dim] = jnp.zeros_like(x, dtype=o_ref.dtype)


def learned_sinusoidal_pos_emb(x, weights, emb_dim, out_dtype=jnp.float32):
    """x: (B,) float timesteps; weights: (emb_dim//2,) learned frequencies.

    Returns (B, emb_dim + 1) == cat((x, sin, cos), -1) [+ zero pad if emb_dim odd],
    matching the PyTorch forward exactly (same column order, same dtype view).
    """
    half_dim = emb_dim // 2
    if half_dim < 1:
        raise ValueError("emb_dim must be >= 2 for LearnedSinusoidalPosEmb")
    pad_last = (emb_dim % 2 == 1)
    out_dim = 1 + 2 * half_dim + (1 if pad_last else 0)   # == emb_dim + 1
    B = x.shape[0]

    # Batch tile on the sublane axis; no wrapper-side padding (ragged tail is
    # handled by Pallas).  B <= 128 -> single full-extent block.
    TB = B if B <= _MAX_TB else _MAX_TB
    grid = (pl.cdiv(B, TB),)

    x2 = x.astype(jnp.float32).reshape(B, 1)               # free reshape of 1-D input
    w2 = weights.astype(jnp.float32).reshape(1, half_dim)  # tiny, reused every step

    kernel = functools.partial(_learned_sinusoidal_kernel, pad_last=pad_last)

    return pl.pallas_call(
        kernel,
        out_shape=jax.ShapeDtypeStruct((B, out_dim), out_dtype),
        grid=grid,
        in_specs=[
            pl.BlockSpec((TB, 1), lambda i: (i, 0)),            # x rows
            pl.BlockSpec((1, half_dim), lambda i: (0, 0)),      # weights (replicated)
        ],
        out_specs=pl.BlockSpec((TB, out_dim), lambda i: (i, 0)),
        compiler_params=pltpu.CompilerParams(
            dimension_semantics=("parallel",),   # shard batch tiles across v7x TCs
        ),
    )(x2, w2)


def reference(x, weights, emb_dim):
    """Pure-JAX reference mirroring the PyTorch forward."""
    x = x[:, None].astype(jnp.float32)
    freqs = x * weights[None, :] * 2.0 * math.pi
    fouriered = jnp.concatenate([jnp.sin(freqs), jnp.cos(freqs)], axis=-1)
    fouriered = jnp.concatenate([x, fouriered], axis=-1)
    if emb_dim % 2 == 1:
        fouriered = jnp.pad(fouriered, ((0, 0), (0, 1)))
    return fouriered


if __name__ == "__main__":
    key = jax.random.PRNGKey(0)

    # Case 1: even emb_dim, small batch (single full-extent block).
    emb_dim = 32
    B = 8
    kx, kw = jax.random.split(key)
    weights = jax.random.normal(kw, (emb_dim // 2,), dtype=jnp.float32)
    # Modest-magnitude timesteps (t in [0,1), as in continuous-time diffusion):
    # keeps f32 sin/cos range-reduction differences far below the tolerance.
    x = jax.random.uniform(kx, (B,), dtype=jnp.float32)

    out = jax.block_until_ready(learned_sinusoidal_pos_emb(x, weights, emb_dim))
    ref = reference(x, weights, emb_dim)
    assert out.shape == (B, emb_dim + 1), out.shape
    assert jnp.allclose(out, ref, atol=1e-5, rtol=1e-5), "mismatch vs reference (even)"

    # Case 2: odd emb_dim (zero-pad column) + batch that is not a multiple of the
    # tile (exercises the Pallas ragged-tail block with no wrapper padding).
    emb_dim2 = 33
    B2 = 200
    kx2, kw2 = jax.random.split(kw)
    weights2 = jax.random.normal(kw2, (emb_dim2 // 2,), dtype=jnp.float32)
    x2 = jax.random.uniform(kx2, (B2,), dtype=jnp.float32)

    out2 = jax.block_until_ready(learned_sinusoidal_pos_emb(x2, weights2, emb_dim2))
    ref2 = reference(x2, weights2, emb_dim2)
    assert out2.shape == (B2, emb_dim2 + 1), out2.shape
    assert jnp.allclose(out2, ref2, atol=1e-5, rtol=1e-5), "mismatch vs reference (odd)"

    print("KERNEL_OK")
</pallas_src>

<mosaic_0001>
module attributes {stable_mosaic.version = 11 : i64} {
  func.func @_learned_sinusoidal_kernel(%arg0: i32, %arg1: memref<8x1xf32, #tpu.memory_space<vmem>>, %arg2: memref<1x16xf32, #tpu.memory_space<vmem>>, %arg3: memref<8x33xf32, #tpu.memory_space<vmem>>) attributes {dimension_semantics = [#tpu.dimension_semantics<parallel>], iteration_bounds = array<i64: 1>, scalar_prefetch = 0 : i64, scratch_operands = 0 : i64, tpu.core_type = #tpu.core_type<tc>, window_params = [{transform_indices = @transform_0, window_bounds = array<i64: 8, 1>}, {pipeline_mode = #tpu.pipeline_mode<synchronous>, transform_indices = @transform_1, window_bounds = array<i64: 1, 16>}, {transform_indices = @transform_2, window_bounds = array<i64: 8, 33>}]} {
    %c0 = arith.constant 0 : index
    %c0_0 = arith.constant 0 : index
    %0 = vector.load %arg1[%c0, %c0_0] : memref<8x1xf32, #tpu.memory_space<vmem>>, vector<8x1xf32>
    %c0_1 = arith.constant 0 : index
    %c0_2 = arith.constant 0 : index
    %1 = vector.load %arg2[%c0_1, %c0_2] : memref<1x16xf32, #tpu.memory_space<vmem>>, vector<1x16xf32>
    %cst = arith.constant 6.28318548 : f32
    %2 = vector.broadcast %cst : f32 to vector<1x16xf32>
    %3 = arith.mulf %1, %2 : vector<1x16xf32>
    %4 = vector.broadcast %0 : vector<8x1xf32> to vector<8x16xf32>
    %5 = vector.broadcast %3 : vector<1x16xf32> to vector<8x16xf32>
    %6 = arith.mulf %4, %5 : vector<8x16xf32>
    %c0_3 = arith.constant 0 : index
    %c0_4 = arith.constant 0 : index
    %7 = vector.load %arg3[%c0_3, %c0_4] : memref<8x33xf32, #tpu.memory_space<vmem>>, vector<8x1xf32>
    tpu.vector_store %arg3[%c0_3, %c0_4], %0 {strides = array<i32>} : memref<8x33xf32, #tpu.memory_space<vmem>>, vector<8x1xf32>,
    %8 = math.sin %6 : vector<8x16xf32>
    %c0_5 = arith.constant 0 : index
    %c1 = arith.constant 1 : index
    %9 = vector.load %arg3[%c0_5, %c1] : memref<8x33xf32, #tpu.memory_space<vmem>>, vector<8x16xf32>
    tpu.vector_store %arg3[%c0_5, %c1], %8 {strides = array<i32>} : memref<8x33xf32, #tpu.memory_space<vmem>>, vector<8x16xf32>,
    %10 = math.cos %6 : vector<8x16xf32>
    %c0_6 = arith.constant 0 : index
    %c17 = arith.constant 17 : index
    %11 = vector.load %arg3[%c0_6, %c17] : memref<8x33xf32, #tpu.memory_space<vmem>>, vector<8x16xf32>
    tpu.vector_store %arg3[%c0_6, %c17], %10 {strides = array<i32>} : memref<8x33xf32, #tpu.memory_space<vmem>>, vector<8x16xf32>,
    return
  }
  func.func @transform_0(%arg0: i32) -> (i32, i32) {
    %c0_i32 = arith.constant 0 : i32
    %c0_i32_0 = arith.constant 0 : i32
    return %arg0, %c0_i32 : i32, i32
  }
  func.func @transform_1(%arg0: i32) -> (i32, i32) {
    %c0_i32 = arith.constant 0 : i32
    %c0_i32_0 = arith.constant 0 : i32
    %c0_i32_1 = arith.constant 0 : i32
    return %c0_i32, %c0_i32_0 : i32, i32
  }
  func.func @transform_2(%arg0: i32) -> (i32, i32) {
    %c0_i32 = arith.constant 0 : i32
    %c0_i32_0 = arith.constant 0 : i32
    return %arg0, %c0_i32 : i32, i32
  }
}

</mosaic_0001>

<llo_original>
// kernel: tpu_custom_call.1
$region0: #{tpu_custom_call.1}
  #allocation0 [shape = 'u32[]', space=smem, size = 0x4, offset = 0x4, fixed_abs, tag = 'smem constant byte address 0x4 - core index']
  #allocation1 [shape = 'u32[144,128]{1,0:T(1,128)}', space=vmem, size = 0x12000, scoped, tag = 'internal scratch']
  %s0 = inlined_call_operand.vmem [shape: f32[8,1], index: 0, kind: input, shape index: {}]
  %s1 = inlined_call_operand.vmem [shape: f32[1,16], index: 1, kind: input, shape index: {}]
  %s2 = inlined_call_operand.hbm [shape: f32[8,33], index: 2, kind: output, shape index: {}]
  %s3 = sld [smem:[#allocation0]]
  $region18: #{tpu_custom_call.1} parent=0
    _
  %s5 = ssub.s32 1, %s3
  %s6 = scalar_select 0, %s5, %s3
  $region1: #{tpu_custom_call.1} parent=0
    #allocation2 [shape = 'u8[4096]{0}', space=vmem, size = 0x1000, scoped, tag = 'output window, operand 0, single buffered']
    #allocation3 [shape = 's32[1]{0}', space=sflag, size = 0x4, scoped, tag = 'scoped memory for tpu_custom_call.1']
    %7 = vsyncpa [#allocation3], 0
    // Predicated region
    $region2: #{tpu_custom_call.1} parent=1 // pred_check
      _
    $region3: #{tpu_custom_call.1} parent=1 // pred_check_branch
      %9 = sbr.rel (0) target = $region5
    $region4: #{tpu_custom_call.1} parent=1 // pred_region
      _
    $region5: #{tpu_custom_call.1} parent=1 // pred_fallthru
      _
    // Predicated region
    $region6: #{tpu_custom_call.1} parent=1 // pred_check
      _
    $region7: #{tpu_custom_call.1} parent=1 // pred_check_branch
      %11 = sbr.rel (0) target = $region9
    $region8: #{tpu_custom_call.1} parent=1 // pred_region
      _
    $region9: #{tpu_custom_call.1} parent=1 // pred_fallthru
      _
    %v12 = vld [vmem:[%s0] sm:$0xff]
    %v13 = vld [vmem:[%s1] sm:$0x1]
    %v14 = vmul.f32 %v13, 6.2831855
    %16 = vset.pattern.permute.xlu0 0
    %17 = vperm.xlu0 %16, %v12
    %v18 = vpop.permute.xlu0 %17
    %v21 = vlaneseq
    %v22 = vshrl.u32 %v21, 7
    %v23 = vsub.s32 0, %v22
    %v24 = vrot.slane %v14, %v23
    %v26 = vmul.f32 %v18, %v24
    %vm27 = vcmask 7168
    %28 = vst.msk [vmem:[#allocation2] sm:$0xff] %vm27, %v12
    %v29 = vand.u32 2147483647, %v26
    %vm30 = vcmp.le.f32.partialorder %v29, 0.7853982
    %vm31 = vcmp.lt.s32.totalorder %v26, 0
    %v32 = vand.u32 %v26, 2139095040
    %v33 = vshrl.u32 %v32, 23
    %v34 = vsub.s32 %v33, 127
    %v35 = vand.u32 2147483647, %v26
    %v36 = vand.u32 %v35, 8388607
    %v37 = vor.u32 %v36, 8388608
    %v38 = vsub.s32 0, %v37
    %v39 = vadd.s32 %v34, 1
    %vm40 = vcmp.gt.s32.totalorder %v39, 0
    %v41 = vsel %vm40, %v39, 0
    %v42 = vshrl.u32 %v41, 5
    %v43 = vand.u32 %v41, 31
    %v44 = vsub.s32 32, %v43
    %v45 = vshrl.u32 683565275, %v44
    %v46 = vshll.u32 683565275, %v43
    %v47 = vshrl.u32 2475754826, %v44
    %v48 = vor.u32 %v46, %v47
    %v49 = vshll.u32 2475754826, %v43
    %v50 = vshrl.u32 2131351028, %v44
    %v51 = vor.u32 %v49, %v50
    %v52 = vshll.u32 2131351028, %v43
    %v53 = vshrl.u32 2102212464, %v44
    %v54 = vor.u32 %v52, %v53
    %v55 = vshll.u32 2102212464, %v43
    %v56 = vshrl.u32 920167782, %v44
    %v57 = vor.u32 %v55, %v56
    %v58 = vshll.u32 920167782, %v43
    %v59 = vshrl.u32 1326507024, %v44
    %v60 = vor.u32 %v58, %v59
    %vm61 = vcmp.lt.s32.totalorder %v42, 1
    %vm62 = vcmp.lt.s32.totalorder %v42, 2
    %vm63 = vcmp.lt.s32.totalorder %v42, 3
    %vm64 = vcmp.lt.s32.totalorder %v42, 4
    %v65 = vsel %vm61, %v45, %v48
    %v66 = vsel %vm64, %v54, 2102212464
    %v67 = vsel %vm63, %v51, %v66
    %v68 = vsel %vm62, %v65, %v67
    %v69 = vsel %vm61, %v48, %v51
    %v70 = vsel %vm64, %v57, 920167782
    %v71 = vsel %vm63, %v54, %v70
    %v72 = vsel %vm62, %v69, %v71
    %v73 = vsel %vm61, %v51, %v54
    %v74 = vsel %vm64, %v60, 1326507024
    %v75 = vsel %vm63, %v57, %v74
    %v76 = vsel %vm62, %v73, %v75
    %v77 = vshll.u32 %v37, 8
    %v78 = vmul.u32.u64.compose %v77, %v76
    %v79 = vextract.low.u32 %v78
    %v80 = vextract.high.u32 %v78
    %v81 = vmul.u32.u64.compose %v77, %v72
    %v82 = vextract.low.u32 %v81
    %v83 = vextract.high.u32 %v81
    %v84 = vmul.u32 %v77, %v68
    %v85 = vadd.s32 %v80, %v82
    %vm86 = vc.u32 %v80, %v82
    %v87 = vadd.s32 %v83, 1
    %v88 = vsel %vm86, %v87, %v83
    %v89 = vadd.s32 %v84, %v88
    %v90 = vadd.s32 %v89, 536870912
    %v91 = vshrl.u32 %v90, 30
    %v92 = vshll.u32 %v91, 30
    %v93 = vsub.s32 %v89, %v92
    %vm94 = vcmp.lt.s32.totalorder %v93, 0
    %v95 = vsub.s32 0, %v93
    %v96 = vsel %vm94, %v95, %v93
    %v97 = vclz %v96
    %v98 = vsub.s32 %v97, 2
    %vm99 = vcmp.gt.s32.totalorder 0, %v98
    %v100 = vsel %vm99, 0, %v98
    %v101 = vsub.s32 32, %v100
    %v102 = vshll.u32 %v93, %v100
    %v103 = vshrl.u32 %v85, %v101
    %v104 = vor.u32 %v102, %v103
    %v105 = vsub.s32 4294967266, %v100
    %v106 = vadd.s32 %v105, 127
    %v107 = vshll.u32 %v106, 23
    %v108 = vor.u32 4788187, %v107
    %v109 = vand.u32 2147483647, %v108
    %v111 = vcvt.s32.f32 %v104
    %v112 = vmul.f32 %v111, %v109
    %v113 = vxor.u32 %v112, 2147483648
    %v114 = vsel %vm31, %v113, %v112
    %v115 = vsub.s32 4, %v91
    %v116 = vsel %vm31, %v115, %v91
    %v117 = vsel %vm30, %v26, %v114
    %v118 = vsel %vm30, 0, %v116
    %v119 = vcosq.f32.pop %v117
    %v120 = vsinq.f32.pop %v117
    %vm121 = vweird.f32 %v26
    %v122 = vadd.s32 %v118, 3
    %v123 = vand.u32 %v122, 3
    %vm124 = vcmp.lt.s32.totalorder %v123, 2
    %vm125 = vcmp.eq.s32.totalorder %v123, 0
    %v126 = vxor.u32 %v120, 2147483648
    %v127 = vsel %vm125, %v119, %v126
    %vm128 = vcmp.eq.s32.totalorder %v123, 2
    %v129 = vxor.u32 %v119, 2147483648
    %v130 = vsel %vm128, %v129, %v120
    %v131 = vsel %vm124, %v127, %v130
    %v132 = vsel %vm121, nan, %v131
    %134 = vrot.lane.b32.xlu0 %v132, 1
    %v135 = vpop.permute.xlu0 %134
    %vm137 = vcmask 138248
    %138 = vst.msk [vmem:[#allocation2] sm:$0xff] %vm137, %v135
    %v139 = vand.u32 2147483647, %v26
    %vm140 = vcmp.le.f32.partialorder %v139, 0.7853982
    %vm141 = vcmp.lt.s32.totalorder %v26, 0
    %v142 = vand.u32 %v26, 2139095040
    %v143 = vshrl.u32 %v142, 23
    %v144 = vsub.s32 %v143, 127
    %v145 = vand.u32 2147483647, %v26
    %v146 = vand.u32 %v145, 8388607
    %v147 = vor.u32 %v146, 8388608
    %v148 = vsub.s32 0, %v147
    %v149 = vadd.s32 %v144, 1
    %vm150 = vcmp.gt.s32.totalorder %v149, 0
    %v151 = vsel %vm150, %v149, 0
    %v152 = vshrl.u32 %v151, 5
    %v153 = vand.u32 %v151, 31
    %v154 = vsub.s32 32, %v153
    %v155 = vshrl.u32 683565275, %v154
    %v156 = vshll.u32 683565275, %v153
    %v157 = vshrl.u32 2475754826, %v154
    %v158 = vor.u32 %v156, %v157
    %v159 = vshll.u32 2475754826, %v153
    %v160 = vshrl.u32 2131351028, %v154
    %v161 = vor.u32 %v159, %v160
    %v162 = vshll.u32 2131351028, %v153
    %v163 = vshrl.u32 2102212464, %v154
    %v164 = vor.u32 %v162, %v163
    %v165 = vshll.u32 2102212464, %v153
    %v166 = vshrl.u32 920167782, %v154
    %v167 = vor.u32 %v165, %v166
    %v168 = vshll.u32 920167782, %v153
    %v169 = vshrl.u32 1326507024, %v154
    %v170 = vor.u32 %v168, %v169
    %vm171 = vcmp.lt.s32.totalorder %v152, 1
    %vm172 = vcmp.lt.s32.totalorder %v152, 2
    %vm173 = vcmp.lt.s32.totalorder %v152, 3
    %vm174 = vcmp.lt.s32.totalorder %v152, 4
    %v175 = vsel %vm171, %v155, %v158
    %v176 = vsel %vm174, %v164, 2102212464
    %v177 = vsel %vm173, %v161, %v176
    %v178 = vsel %vm172, %v175, %v177
    %v179 = vsel %vm171, %v158, %v161
    %v180 = vsel %vm174, %v167, 920167782
    %v181 = vsel %vm173, %v164, %v180
    %v182 = vsel %vm172, %v179, %v181
    %v183 = vsel %vm171, %v161, %v164
    %v184 = vsel %vm174, %v170, 1326507024
    %v185 = vsel %vm173, %v167, %v184
    %v186 = vsel %vm172, %v183, %v185
    %v187 = vshll.u32 %v147, 8
    %v188 = vmul.u32.u64.compose %v187, %v186
    %v189 = vextract.low.u32 %v188
    %v190 = vextract.high.u32 %v188
    %v191 = vmul.u32.u64.compose %v187, %v182
    %v192 = vextract.low.u32 %v191
    %v193 = vextract.high.u32 %v191
    %v194 = vmul.u32 %v187, %v178
    %v195 = vadd.s32 %v190, %v192
    %vm196 = vc.u32 %v190, %v192
    %v197 = vadd.s32 %v193, 1
    %v198 = vsel %vm196, %v197, %v193
    %v199 = vadd.s32 %v194, %v198
    %v200 = vadd.s32 %v199, 536870912
    %v201 = vshrl.u32 %v200, 30
    %v202 = vshll.u32 %v201, 30
    %v203 = vsub.s32 %v199, %v202
    %vm204 = vcmp.lt.s32.totalorder %v203, 0
    %v205 = vsub.s32 0, %v203
    %v206 = vsel %vm204, %v205, %v203
    %v207 = vclz %v206
    %v208 = vsub.s32 %v207, 2
    %vm209 = vcmp.gt.s32.totalorder 0, %v208
    %v210 = vsel %vm209, 0, %v208
    %v211 = vsub.s32 32, %v210
    %v212 = vshll.u32 %v203, %v210
    %v213 = vshrl.u32 %v195, %v211
    %v214 = vor.u32 %v212, %v213
    %v215 = vsub.s32 4294967266, %v210
    %v216 = vadd.s32 %v215, 127
    %v217 = vshll.u32 %v216, 23
    %v218 = vor.u32 4788187, %v217
    %v219 = vand.u32 2147483647, %v218
    %v221 = vcvt.s32.f32 %v214
    %v222 = vmul.f32 %v221, %v219
    %v223 = vxor.u32 %v222, 2147483648
    %v224 = vsel %vm141, %v223, %v222
    %v225 = vsub.s32 4, %v201
    %v226 = vsel %vm141, %v225, %v201
    %v227 = vsel %vm140, %v26, %v224
    %v228 = vsel %vm140, 0, %v226
    %v229 = vcosq.f32.pop %v227
    %v230 = vsinq.f32.pop %v227
    %vm231 = vweird.f32 %v26
    %v232 = vand.u32 %v228, 3
    %vm233 = vcmp.lt.s32.totalorder %v232, 2
    %vm234 = vcmp.eq.s32.totalorder %v232, 0
    %v235 = vxor.u32 %v230, 2147483648
    %v236 = vsel %vm234, %v229, %v235
    %vm237 = vcmp.eq.s32.totalorder %v232, 2
    %v238 = vxor.u32 %v229, 2147483648
    %v239 = vsel %vm237, %v238, %v230
    %v240 = vsel %vm233, %v236, %v239
    %v241 = vsel %vm231, nan, %v240
    %243 = vrot.lane.b32.xlu0 %v241, 17
    %v244 = vpop.permute.xlu0 %243
    %vm246 = vcmask 269448
    %247 = vst.msk [vmem:[#allocation2] sm:$0xff] %vm246, %v244
    // Predicated region
    $region10: #{tpu_custom_call.1} parent=1 // pred_check
      _
    $region11: #{tpu_custom_call.1} parent=1 // pred_check_branch
      %249 = sbr.rel (0) target = $region13
    $region12: #{tpu_custom_call.1} parent=1 // pred_region
      %s251 = ssub.s32 128, 128
      %252 = vsyncadd [#allocation3], %s251
      %s254 = sshll.u32 [#allocation2], 4
      %s255 = int_to_ptr.vmem [resolvable:$true] %s254
      %257 = dma.vmem_to_hbm [thread:$0]  %s255, 128, %s2, [#allocation3]
    $region13: #{tpu_custom_call.1} parent=1 // pred_fallthru
      _
    // Predicated region
    $region14: #{tpu_custom_call.1} parent=1 // pred_check
      _
    $region15: #{tpu_custom_call.1} parent=1 // pred_check_branch
      %259 = sbr.rel (0) target = $region17
    $region16: #{tpu_custom_call.1} parent=1 // pred_region
      %260 = dma.done [#allocation3], 128
    $region17: #{tpu_custom_call.1} parent=1 // pred_fallthru
      _
    %261 = vsyncpa [#allocation3], 1

</llo_original>
